<compile_context>
chip_gen: v5e
topology: v5e:2x2
jax: 0.10.0
libtpu: 0.0.40
codegen_flags: <defaults>
</compile_context>

<pallas_src>
import functools

import numpy as np
import jax
import jax.numpy as jnp
from jax.experimental import pallas as pl
from jax.experimental.pallas import tpu as pltpu


# Keep per-kernel VMEM footprint (double-buffered blocks + block-sized temporaries) under
# ~32 MiB and request 48 MiB of scoped VMEM: safe on v7x (64 MiB physical per TC) and well
# above the 16/32 MiB scoped defaults on v5e/v6e.
_VMEM_BLOCK_BUDGET = 32 * 1024 * 1024
_VMEM_LIMIT_BYTES = 48 * 1024 * 1024


def _round_up(x, m):
    return (x + m - 1) // m * m


def _row_tiling(rows, bytes_per_row, budget=_VMEM_BLOCK_BUDGET):
    """Split `rows` (each row = 128 lanes) into n equal tiles of tr rows (tr % 8 == 0) with
    tr * bytes_per_row <= budget.  Returns (tr, n); the caller pads rows up to tr * n."""
    cap = max(8, (budget // max(1, bytes_per_row)) // 8 * 8)
    rows8 = _round_up(max(rows, 1), 8)
    if rows8 <= cap:
        return rows8, 1
    n = -(-rows8 // cap)                       # ceil
    tr = _round_up(-(-rows8 // n), 8)          # <= cap, padding <= n*8 rows
    return tr, n


# ----------------------------------------------------------------------------- kernels


def _ce_prob_kernel(pred_ref, tgt_ref, loss_ref, p_ref, *, ignore_label):
    """Per-pixel cross-entropy loss + softmax prob of the target class.

    pred_ref: (B, C, TR, 128) f32 logits; tgt_ref/loss_ref/p_ref: (B, 1, TR, 128).
    Class reductions are unrolled over static slices of the VMEM block, so everything is
    per-vreg VALU/EUP work and the outputs store fully dense (TR, 128) tiles.
    """
    num_classes = pred_ref.shape[1]

    t = tgt_ref[...]                                      # (B, 1, TR, 128) int32
    valid = t != ignore_label
    tc = jnp.where(valid, t, 0)                           # clamp ignore -> class 0

    # running max over classes
    m = pred_ref[:, 0:1]
    for c in range(1, num_classes):
        m = jnp.maximum(m, pred_ref[:, c:c + 1])

    # sum of exp(x - m) and the target-class logit, one unrolled pass
    se = jnp.zeros_like(m)
    x_t = jnp.zeros_like(m)
    for c in range(num_classes):
        xc = pred_ref[:, c:c + 1]
        se = se + jnp.exp(xc - m)
        x_t = x_t + jnp.where(tc == c, xc, 0.0)

    loss = (m - x_t) + jnp.log(se)                        # logsumexp - x_t
    p_t = jnp.exp(-loss)                                  # softmax prob of target class (EUP)

    loss_ref[...] = jnp.where(valid, loss, 0.0)
    p_ref[...] = jnp.where(valid, p_t, jnp.inf)           # ignored/padded never selected


def _ohem_mean_kernel(loss_ref, p_ref, thr_ref, out_ref, sum_acc, cnt_acc):
    """Masked mean of losses over pixels with p < threshold (resident (1,1) accumulators)."""
    step = pl.program_id(0)

    @pl.when(step == 0)
    def _():
        sum_acc[...] = jnp.zeros_like(sum_acc)
        cnt_acc[...] = jnp.zeros_like(cnt_acc)

    lblk = loss_ref[...]                                  # (TRB, 128)
    sel = p_ref[...] < thr_ref[...]                       # (1, 1) threshold broadcast

    sum_acc[...] += jnp.sum(jnp.where(sel, lblk, 0.0), keepdims=True)   # (1, 1)
    cnt_acc[...] += jnp.sum(sel.astype(jnp.float32), keepdims=True)     # (1, 1)

    @pl.when(step == pl.num_programs(0) - 1)
    def _():
        out_ref[...] = sum_acc[...] / cnt_acc[...]        # NaN if nothing kept (torch: mean of empty)


# ----------------------------------------------------------------------------- wrapper


def ohem_ce_loss(seg_pred, seg_targets, *, ignore_label=-1, thresh=0.7, min_kept=100000):
    """seg_pred: (B, C, H, W) f32 logits; seg_targets: (B, H, W) int labels (ignore_label allowed)."""
    B, C, H, W = seg_pred.shape
    L = H * W
    min_kept = max(1, int(min_kept))

    # ---- lane-dense layout: pixels -> (R, 128) rows, padded rows filled with ignore_label.
    # Per-row VMEM for kernel A: double-buffered logits/labels/outputs (2*(C+3) f32 per lane)
    # plus a handful of (B, 1, row, 128) temporaries.
    bytes_per_row_a = 512 * B * (2 * (C + 3) + 8)
    tr_a, n_ra = _row_tiling(-(-L // 128), bytes_per_row_a)
    R = tr_a * n_ra
    Lp = R * 128

    pred = seg_pred.reshape(B, C, L).astype(jnp.float32)
    tgt = seg_targets.reshape(B, 1, L).astype(jnp.int32)
    if Lp != L:
        pad = Lp - L
        pred = jnp.pad(pred, ((0, 0), (0, 0), (0, pad)))
        tgt = jnp.pad(tgt, ((0, 0), (0, 0), (0, pad)), constant_values=ignore_label)
    pred4 = pred.reshape(B, C, R, 128)
    tgt4 = tgt.reshape(B, 1, R, 128)

    # ---- kernel A: per-pixel CE loss + target-class probability (streaming, parallel) -----
    loss4, p4 = pl.pallas_call(
        functools.partial(_ce_prob_kernel, ignore_label=ignore_label),
        out_shape=(jax.ShapeDtypeStruct((B, 1, R, 128), jnp.float32),
                   jax.ShapeDtypeStruct((B, 1, R, 128), jnp.float32)),
        grid_spec=pltpu.PrefetchScalarGridSpec(
            num_scalar_prefetch=0,
            grid=(n_ra,),
            in_specs=[
                pl.BlockSpec((B, C, tr_a, 128), lambda r: (0, 0, r, 0)),   # logits
                pl.BlockSpec((B, 1, tr_a, 128), lambda r: (0, 0, r, 0)),   # labels
            ],
            out_specs=[
                pl.BlockSpec((B, 1, tr_a, 128), lambda r: (0, 0, r, 0)),   # per-pixel CE loss
                pl.BlockSpec((B, 1, tr_a, 128), lambda r: (0, 0, r, 0)),   # target-class prob
            ],
        ),
        compiler_params=pltpu.CompilerParams(
            dimension_semantics=("parallel",),
            vmem_limit_bytes=_VMEM_LIMIT_BYTES),
    )(pred4, tgt4)

    # ---- OHEM threshold: k-th smallest target prob among valid pixels ----------------------
    # top_k replaces the previous full jnp.sort: the selection only needs one order statistic.
    # Ignored/padded pixels carry p = +inf so they always sort last; if n_valid == 0 the
    # threshold becomes +inf and the result is NaN (PyTorch would raise on that edge case).
    n_valid = jnp.sum((seg_targets.reshape(-1) != ignore_label).astype(jnp.int32))
    k_sel = int(min(min_kept + 1, B * L))
    neg_smallest, _ = jax.lax.top_k(-p4.reshape(-1), k_sel)
    p_ascending = -neg_smallest                               # k_sel smallest probs, ascending
    idx = jnp.clip(jnp.minimum(jnp.int32(min_kept), n_valid - 1), 0, k_sel - 1)
    min_value = p_ascending[idx]
    threshold = jnp.maximum(min_value, jnp.float32(thresh)).reshape(1, 1)

    # ---- kernel B: mean of losses over hard examples (p < threshold) -----------------------
    # loss/p are only 2 f32 per pixel, so coalesce several kernel-A row tiles per step.
    loss2 = loss4.reshape(B * R, 128)
    p2 = p4.reshape(B * R, 128)
    cap_b = max(8, (_VMEM_BLOCK_BUDGET // (512 * 7)) // 8 * 8)
    m_co = 1
    for d in range(1, n_ra + 1):
        if n_ra % d == 0 and tr_a * d <= cap_b:
            m_co = d
    tr_b = tr_a * m_co
    n_rb = (B * R) // tr_b

    out = pl.pallas_call(
        _ohem_mean_kernel,
        out_shape=jax.ShapeDtypeStruct((1, 1), jnp.float32),
        grid_spec=pltpu.PrefetchScalarGridSpec(
            num_scalar_prefetch=0,
            grid=(n_rb,),
            in_specs=[
                pl.BlockSpec((tr_b, 128), lambda r: (r, 0)),   # losses
                pl.BlockSpec((tr_b, 128), lambda r: (r, 0)),   # probs
                pl.BlockSpec((1, 1), lambda r: (0, 0)),        # threshold (resident)
            ],
            out_specs=pl.BlockSpec((1, 1), lambda r: (0, 0)),
            scratch_shapes=[pltpu.VMEM((1, 1), jnp.float32),
                            pltpu.VMEM((1, 1), jnp.float32)],
        ),
        compiler_params=pltpu.CompilerParams(
            dimension_semantics=("arbitrary",),
            vmem_limit_bytes=_VMEM_LIMIT_BYTES),
    )(loss2, p2, threshold)
    return out[0, 0]


# ----------------------------------------------------------------------------- reference


def reference_numpy(seg_pred, seg_targets, ignore_label, thresh, min_kept):
    pred = np.asarray(seg_pred, dtype=np.float64)            # (B, C, H, W)
    tgt = np.asarray(seg_targets).astype(np.int64)           # (B, H, W)
    B, C, H, W = pred.shape
    x = pred.transpose(0, 2, 3, 1).reshape(-1, C)            # (N, C)
    t = tgt.reshape(-1)
    valid = t != ignore_label
    tc = np.where(valid, t, 0)
    m = x.max(axis=1)
    lse = m + np.log(np.exp(x - m[:, None]).sum(axis=1))
    x_t = x[np.arange(x.shape[0]), tc]
    pixel_losses = np.where(valid, lse - x_t, 0.0)
    p_t = np.exp(x_t - lse)

    pv = p_t[valid]
    lv = pixel_losses[valid]
    order = np.argsort(pv, kind="stable")
    pv_sorted = pv[order]
    lv_sorted = lv[order]
    min_kept = max(1, min_kept)
    min_value = pv_sorted[min(min_kept, pv_sorted.size - 1)]
    threshold = max(min_value, thresh)
    kept = lv_sorted[pv_sorted < threshold]
    return kept.mean()


# ----------------------------------------------------------------------------- main


if __name__ == "__main__":
    ignore_label, thresh, min_kept = -1, 0.7, 50

    B, C, H, W = 2, 4, 16, 16
    key = jax.random.PRNGKey(0)
    k1, k2, k3 = jax.random.split(key, 3)
    seg_pred = jax.random.normal(k1, (B, C, H, W), dtype=jnp.float32) * 2.0
    labels = jax.random.randint(k2, (B, H, W), 0, C)
    ignore = jax.random.bernoulli(k3, 0.15, (B, H, W))
    seg_targets = jnp.where(ignore, ignore_label, labels).astype(jnp.int32)

    loss_fn = jax.jit(functools.partial(
        ohem_ce_loss, ignore_label=ignore_label, thresh=thresh, min_kept=min_kept))
    loss = jax.block_until_ready(loss_fn(seg_pred, seg_targets))

    ref = reference_numpy(seg_pred, seg_targets, ignore_label, thresh, min_kept)
    np.testing.assert_allclose(np.asarray(loss), ref, rtol=1e-4, atol=1e-4)
    print("KERNEL_OK")
</pallas_src>

<mosaic_0001>
module attributes {stable_mosaic.version = 11 : i64} {
  func.func @_ce_prob_kernel(%arg0: i32, %arg1: memref<2x4x8x128xf32, #tpu.memory_space<vmem>>, %arg2: memref<2x1x8x128xi32, #tpu.memory_space<vmem>>, %arg3: memref<2x1x8x128xf32, #tpu.memory_space<vmem>>, %arg4: memref<2x1x8x128xf32, #tpu.memory_space<vmem>>) attributes {dimension_semantics = [#tpu.dimension_semantics<parallel>], iteration_bounds = array<i64: 1>, scalar_prefetch = 0 : i64, scratch_operands = 0 : i64, tpu.core_type = #tpu.core_type<tc>, window_params = [{transform_indices = @transform_0, window_bounds = array<i64: 2, 4, 8, 128>}, {transform_indices = @transform_1, window_bounds = array<i64: 2, 1, 8, 128>}, {transform_indices = @transform_2, window_bounds = array<i64: 2, 1, 8, 128>}, {transform_indices = @transform_3, window_bounds = array<i64: 2, 1, 8, 128>}]} {
    %c0 = arith.constant 0 : index
    %c0_0 = arith.constant 0 : index
    %c0_1 = arith.constant 0 : index
    %c0_2 = arith.constant 0 : index
    %0 = vector.load %arg2[%c0, %c0_0, %c0_1, %c0_2] : memref<2x1x8x128xi32, #tpu.memory_space<vmem>>, vector<2x1x8x128xi32>
    %c-1_i32 = arith.constant -1 : i32
    %1 = vector.broadcast %c-1_i32 : i32 to vector<2x1x8x128xi32>
    %2 = arith.cmpi ne, %0, %1 : vector<2x1x8x128xi32>
    %c0_i32 = arith.constant 0 : i32
    %3 = vector.broadcast %c0_i32 : i32 to vector<2x1x8x128xi32>
    %4 = arith.select %2, %0, %3 : vector<2x1x8x128xi1>, vector<2x1x8x128xi32>
    %c0_3 = arith.constant 0 : index
    %c0_4 = arith.constant 0 : index
    %c0_5 = arith.constant 0 : index
    %c0_6 = arith.constant 0 : index
    %5 = vector.load %arg1[%c0_3, %c0_4, %c0_5, %c0_6] : memref<2x4x8x128xf32, #tpu.memory_space<vmem>>, vector<2x1x8x128xf32>
    %c0_7 = arith.constant 0 : index
    %c1 = arith.constant 1 : index
    %c0_8 = arith.constant 0 : index
    %c0_9 = arith.constant 0 : index
    %6 = vector.load %arg1[%c0_7, %c1, %c0_8, %c0_9] : memref<2x4x8x128xf32, #tpu.memory_space<vmem>>, vector<2x1x8x128xf32>
    %7 = arith.maximumf %5, %6 : vector<2x1x8x128xf32>
    %c0_10 = arith.constant 0 : index
    %c2 = arith.constant 2 : index
    %c0_11 = arith.constant 0 : index
    %c0_12 = arith.constant 0 : index
    %8 = vector.load %arg1[%c0_10, %c2, %c0_11, %c0_12] : memref<2x4x8x128xf32, #tpu.memory_space<vmem>>, vector<2x1x8x128xf32>
    %9 = arith.maximumf %7, %8 : vector<2x1x8x128xf32>
    %c0_13 = arith.constant 0 : index
    %c3 = arith.constant 3 : index
    %c0_14 = arith.constant 0 : index
    %c0_15 = arith.constant 0 : index
    %10 = vector.load %arg1[%c0_13, %c3, %c0_14, %c0_15] : memref<2x4x8x128xf32, #tpu.memory_space<vmem>>, vector<2x1x8x128xf32>
    %11 = arith.maximumf %9, %10 : vector<2x1x8x128xf32>
    %cst = arith.constant 0.000000e+00 : f32
    %12 = vector.broadcast %cst : f32 to vector<2x1x8x128xf32>
    %cst_16 = arith.constant 0.000000e+00 : f32
    %13 = vector.broadcast %cst_16 : f32 to vector<2x1x8x128xf32>
    %c0_17 = arith.constant 0 : index
    %c0_18 = arith.constant 0 : index
    %c0_19 = arith.constant 0 : index
    %c0_20 = arith.constant 0 : index
    %14 = vector.load %arg1[%c0_17, %c0_18, %c0_19, %c0_20] : memref<2x4x8x128xf32, #tpu.memory_space<vmem>>, vector<2x1x8x128xf32>
    %15 = arith.subf %14, %11 : vector<2x1x8x128xf32>
    %16 = math.exp %15 : vector<2x1x8x128xf32>
    %17 = arith.addf %12, %16 : vector<2x1x8x128xf32>
    %c0_i32_21 = arith.constant 0 : i32
    %18 = vector.broadcast %c0_i32_21 : i32 to vector<2x1x8x128xi32>
    %19 = arith.cmpi eq, %4, %18 : vector<2x1x8x128xi32>
    %cst_22 = arith.constant 0.000000e+00 : f32
    %20 = vector.broadcast %cst_22 : f32 to vector<2x1x8x128xf32>
    %21 = arith.select %19, %14, %20 : vector<2x1x8x128xi1>, vector<2x1x8x128xf32>
    %22 = arith.addf %13, %21 : vector<2x1x8x128xf32>
    %c0_23 = arith.constant 0 : index
    %c1_24 = arith.constant 1 : index
    %c0_25 = arith.constant 0 : index
    %c0_26 = arith.constant 0 : index
    %23 = vector.load %arg1[%c0_23, %c1_24, %c0_25, %c0_26] : memref<2x4x8x128xf32, #tpu.memory_space<vmem>>, vector<2x1x8x128xf32>
    %24 = arith.subf %23, %11 : vector<2x1x8x128xf32>
    %25 = math.exp %24 : vector<2x1x8x128xf32>
    %26 = arith.addf %17, %25 : vector<2x1x8x128xf32>
    %c1_i32 = arith.constant 1 : i32
    %27 = vector.broadcast %c1_i32 : i32 to vector<2x1x8x128xi32>
    %28 = arith.cmpi eq, %4, %27 : vector<2x1x8x128xi32>
    %cst_27 = arith.constant 0.000000e+00 : f32
    %29 = vector.broadcast %cst_27 : f32 to vector<2x1x8x128xf32>
    %30 = arith.select %28, %23, %29 : vector<2x1x8x128xi1>, vector<2x1x8x128xf32>
    %31 = arith.addf %22, %30 : vector<2x1x8x128xf32>
    %c0_28 = arith.constant 0 : index
    %c2_29 = arith.constant 2 : index
    %c0_30 = arith.constant 0 : index
    %c0_31 = arith.constant 0 : index
    %32 = vector.load %arg1[%c0_28, %c2_29, %c0_30, %c0_31] : memref<2x4x8x128xf32, #tpu.memory_space<vmem>>, vector<2x1x8x128xf32>
    %33 = arith.subf %32, %11 : vector<2x1x8x128xf32>
    %34 = math.exp %33 : vector<2x1x8x128xf32>
    %35 = arith.addf %26, %34 : vector<2x1x8x128xf32>
    %c2_i32 = arith.constant 2 : i32
    %36 = vector.broadcast %c2_i32 : i32 to vector<2x1x8x128xi32>
    %37 = arith.cmpi eq, %4, %36 : vector<2x1x8x128xi32>
    %cst_32 = arith.constant 0.000000e+00 : f32
    %38 = vector.broadcast %cst_32 : f32 to vector<2x1x8x128xf32>
    %39 = arith.select %37, %32, %38 : vector<2x1x8x128xi1>, vector<2x1x8x128xf32>
    %40 = arith.addf %31, %39 : vector<2x1x8x128xf32>
    %c0_33 = arith.constant 0 : index
    %c3_34 = arith.constant 3 : index
    %c0_35 = arith.constant 0 : index
    %c0_36 = arith.constant 0 : index
    %41 = vector.load %arg1[%c0_33, %c3_34, %c0_35, %c0_36] : memref<2x4x8x128xf32, #tpu.memory_space<vmem>>, vector<2x1x8x128xf32>
    %42 = arith.subf %41, %11 : vector<2x1x8x128xf32>
    %43 = math.exp %42 : vector<2x1x8x128xf32>
    %44 = arith.addf %35, %43 : vector<2x1x8x128xf32>
    %c3_i32 = arith.constant 3 : i32
    %45 = vector.broadcast %c3_i32 : i32 to vector<2x1x8x128xi32>
    %46 = arith.cmpi eq, %4, %45 : vector<2x1x8x128xi32>
    %cst_37 = arith.constant 0.000000e+00 : f32
    %47 = vector.broadcast %cst_37 : f32 to vector<2x1x8x128xf32>
    %48 = arith.select %46, %41, %47 : vector<2x1x8x128xi1>, vector<2x1x8x128xf32>
    %49 = arith.addf %40, %48 : vector<2x1x8x128xf32>
    %50 = arith.subf %11, %49 : vector<2x1x8x128xf32>
    %51 = math.log %44 : vector<2x1x8x128xf32>
    %52 = arith.addf %50, %51 : vector<2x1x8x128xf32>
    %cst_38 = arith.constant 0.000000e+00 : f32
    %53 = vector.broadcast %cst_38 : f32 to vector<2x1x8x128xf32>
    %54 = arith.subf %53, %52 : vector<2x1x8x128xf32>
    %55 = math.exp %54 : vector<2x1x8x128xf32>
    %cst_39 = arith.constant 0.000000e+00 : f32
    %56 = vector.broadcast %cst_39 : f32 to vector<2x1x8x128xf32>
    %57 = arith.select %2, %52, %56 : vector<2x1x8x128xi1>, vector<2x1x8x128xf32>
    %c0_40 = arith.constant 0 : index
    %c0_41 = arith.constant 0 : index
    %c0_42 = arith.constant 0 : index
    %c0_43 = arith.constant 0 : index
    %58 = vector.load %arg3[%c0_40, %c0_41, %c0_42, %c0_43] : memref<2x1x8x128xf32, #tpu.memory_space<vmem>>, vector<2x1x8x128xf32>
    tpu.vector_store %arg3[%c0_40, %c0_41, %c0_42, %c0_43], %57 {strides = array<i32>} : memref<2x1x8x128xf32, #tpu.memory_space<vmem>>, vector<2x1x8x128xf32>,
    %cst_44 = arith.constant 0x7F800000 : f32
    %59 = vector.broadcast %cst_44 : f32 to vector<2x1x8x128xf32>
    %60 = arith.select %2, %55, %59 : vector<2x1x8x128xi1>, vector<2x1x8x128xf32>
    %c0_45 = arith.constant 0 : index
    %c0_46 = arith.constant 0 : index
    %c0_47 = arith.constant 0 : index
    %c0_48 = arith.constant 0 : index
    %61 = vector.load %arg4[%c0_45, %c0_46, %c0_47, %c0_48] : memref<2x1x8x128xf32, #tpu.memory_space<vmem>>, vector<2x1x8x128xf32>
    tpu.vector_store %arg4[%c0_45, %c0_46, %c0_47, %c0_48], %60 {strides = array<i32>} : memref<2x1x8x128xf32, #tpu.memory_space<vmem>>, vector<2x1x8x128xf32>,
    return
  }
  func.func @transform_0(%arg0: i32) -> (i32, i32, i32, i32) {
    %c0_i32 = arith.constant 0 : i32
    %c0_i32_0 = arith.constant 0 : i32
    %c0_i32_1 = arith.constant 0 : i32
    %c0_i32_2 = arith.constant 0 : i32
    return %c0_i32, %c0_i32_0, %arg0, %c0_i32_1 : i32, i32, i32, i32
  }
  func.func @transform_1(%arg0: i32) -> (i32, i32, i32, i32) {
    %c0_i32 = arith.constant 0 : i32
    %c0_i32_0 = arith.constant 0 : i32
    %c0_i32_1 = arith.constant 0 : i32
    %c0_i32_2 = arith.constant 0 : i32
    return %c0_i32, %c0_i32_0, %arg0, %c0_i32_1 : i32, i32, i32, i32
  }
  func.func @transform_2(%arg0: i32) -> (i32, i32, i32, i32) {
    %c0_i32 = arith.constant 0 : i32
    %c0_i32_0 = arith.constant 0 : i32
    %c0_i32_1 = arith.constant 0 : i32
    %c0_i32_2 = arith.constant 0 : i32
    return %c0_i32, %c0_i32_0, %arg0, %c0_i32_1 : i32, i32, i32, i32
  }
  func.func @transform_3(%arg0: i32) -> (i32, i32, i32, i32) {
    %c0_i32 = arith.constant 0 : i32
    %c0_i32_0 = arith.constant 0 : i32
    %c0_i32_1 = arith.constant 0 : i32
    %c0_i32_2 = arith.constant 0 : i32
    return %c0_i32, %c0_i32_0, %arg0, %c0_i32_1 : i32, i32, i32, i32
  }
}

module attributes {stable_mosaic.version = 11 : i64} {
  func.func @_ohem_mean_kernel(%arg0: i32, %arg1: memref<8x128xf32, #tpu.memory_space<vmem>>, %arg2: memref<8x128xf32, #tpu.memory_space<vmem>>, %arg3: memref<1x1xf32, #tpu.memory_space<vmem>>, %arg4: memref<1x1xf32, #tpu.memory_space<vmem>>, %arg5: memref<1x1xf32, #tpu.memory_space<vmem>>, %arg6: memref<1x1xf32, #tpu.memory_space<vmem>>) attributes {dimension_semantics = [#tpu.dimension_semantics<arbitrary>], iteration_bounds = array<i64: 2>, scalar_prefetch = 0 : i64, scratch_operands = 2 : i64, tpu.core_type = #tpu.core_type<tc>, window_params = [{transform_indices = @transform_0, window_bounds = array<i64: 8, 128>}, {transform_indices = @transform_1, window_bounds = array<i64: 8, 128>}, {pipeline_mode = #tpu.pipeline_mode<synchronous>, transform_indices = @transform_2, window_bounds = array<i64: 1, 1>}, {pipeline_mode = #tpu.pipeline_mode<synchronous>, transform_indices = @transform_3, window_bounds = array<i64: 1, 1>}]} {
    %c0_i32 = arith.constant 0 : i32
    %0 = arith.cmpi eq, %arg0, %c0_i32 : i32
    %1 = arith.extui %0 : i1 to i32
    %c0_i32_0 = arith.constant 0 : i32
    %2 = arith.cmpi ne, %1, %c0_i32_0 : i32
    scf.if %2 {
      %cst_17 = arith.constant 0.000000e+00 : f32
      %31 = vector.broadcast %cst_17 : f32 to vector<1x1xf32>
      %c0_18 = arith.constant 0 : index
      %c0_19 = arith.constant 0 : index
      %32 = vector.load %arg5[%c0_18, %c0_19] : memref<1x1xf32, #tpu.memory_space<vmem>>, vector<1x1xf32>
      tpu.vector_store %arg5[%c0_18, %c0_19], %31 {strides = array<i32>} : memref<1x1xf32, #tpu.memory_space<vmem>>, vector<1x1xf32>,
      %cst_20 = arith.constant 0.000000e+00 : f32
      %33 = vector.broadcast %cst_20 : f32 to vector<1x1xf32>
      %c0_21 = arith.constant 0 : index
      %c0_22 = arith.constant 0 : index
      %34 = vector.load %arg6[%c0_21, %c0_22] : memref<1x1xf32, #tpu.memory_space<vmem>>, vector<1x1xf32>
      tpu.vector_store %arg6[%c0_21, %c0_22], %33 {strides = array<i32>} : memref<1x1xf32, #tpu.memory_space<vmem>>, vector<1x1xf32>,
    } else {
    }
    %c0 = arith.constant 0 : index
    %c0_1 = arith.constant 0 : index
    %3 = vector.load %arg1[%c0, %c0_1] : memref<8x128xf32, #tpu.memory_space<vmem>>, vector<8x128xf32>
    %c0_2 = arith.constant 0 : index
    %c0_3 = arith.constant 0 : index
    %4 = vector.load %arg2[%c0_2, %c0_3] : memref<8x128xf32, #tpu.memory_space<vmem>>, vector<8x128xf32>
    %c0_4 = arith.constant 0 : index
    %c0_5 = arith.constant 0 : index
    %5 = vector.load %arg3[%c0_4, %c0_5] : memref<1x1xf32, #tpu.memory_space<vmem>>, vector<1x1xf32>
    %6 = vector.broadcast %5 : vector<1x1xf32> to vector<8x128xf32>
    %7 = arith.cmpf olt, %4, %6 : vector<8x128xf32>
    %c0_6 = arith.constant 0 : index
    %c0_7 = arith.constant 0 : index
    %8 = vector.load %arg5[%c0_6, %c0_7] : memref<1x1xf32, #tpu.memory_space<vmem>>, vector<1x1xf32>
    %cst = arith.constant 0.000000e+00 : f32
    %9 = vector.broadcast %cst : f32 to vector<8x128xf32>
    %10 = arith.select %7, %3, %9 : vector<8x128xi1>, vector<8x128xf32>
    %11 = vector.shape_cast %10 : vector<8x128xf32> to vector<1x8x128xf32>
    %cst_8 = arith.constant dense<0.000000e+00> : vector<1xf32>
    %12 = vector.multi_reduction <add>, %11, %cst_8 [1, 2] : vector<1x8x128xf32> to vector<1xf32>
    %13 = vector.shape_cast %12 : vector<1xf32> to vector<1x1x1xf32>
    %14 = vector.extract %13[0, 0, 0] : f32 from vector<1x1x1xf32>
    %15 = vector.broadcast %14 : f32 to vector<1x1xf32>
    %16 = arith.addf %8, %15 : vector<1x1xf32>
    %c0_9 = arith.constant 0 : index
    %c0_10 = arith.constant 0 : index
    %17 = vector.load %arg5[%c0_9, %c0_10] : memref<1x1xf32, #tpu.memory_space<vmem>>, vector<1x1xf32>
    tpu.vector_store %arg5[%c0_9, %c0_10], %16 {strides = array<i32>} : memref<1x1xf32, #tpu.memory_space<vmem>>, vector<1x1xf32>,
    %c0_11 = arith.constant 0 : index
    %c0_12 = arith.constant 0 : index
    %18 = vector.load %arg6[%c0_11, %c0_12] : memref<1x1xf32, #tpu.memory_space<vmem>>, vector<1x1xf32>
    %19 = arith.extui %7 : vector<8x128xi1> to vector<8x128xi32>
    %20 = arith.sitofp %19 : vector<8x128xi32> to vector<8x128xf32>
    %21 = vector.shape_cast %20 : vector<8x128xf32> to vector<1x8x128xf32>
    %cst_13 = arith.constant dense<0.000000e+00> : vector<1xf32>
    %22 = vector.multi_reduction <add>, %21, %cst_13 [1, 2] : vector<1x8x128xf32> to vector<1xf32>
    %23 = vector.shape_cast %22 : vector<1xf32> to vector<1x1x1xf32>
    %24 = vector.extract %23[0, 0, 0] : f32 from vector<1x1x1xf32>
    %25 = vector.broadcast %24 : f32 to vector<1x1xf32>
    %26 = arith.addf %18, %25 : vector<1x1xf32>
    %c0_14 = arith.constant 0 : index
    %c0_15 = arith.constant 0 : index
    %27 = vector.load %arg6[%c0_14, %c0_15] : memref<1x1xf32, #tpu.memory_space<vmem>>, vector<1x1xf32>
    tpu.vector_store %arg6[%c0_14, %c0_15], %26 {strides = array<i32>} : memref<1x1xf32, #tpu.memory_space<vmem>>, vector<1x1xf32>,
    %c1_i32 = arith.constant 1 : i32
    %28 = arith.cmpi eq, %arg0, %c1_i32 : i32
    %29 = arith.extui %28 : i1 to i32
    %c0_i32_16 = arith.constant 0 : i32
    %30 = arith.cmpi ne, %29, %c0_i32_16 : i32
    scf.if %30 {
      %c0_17 = arith.constant 0 : index
      %c0_18 = arith.constant 0 : index
      %31 = vector.load %arg5[%c0_17, %c0_18] : memref<1x1xf32, #tpu.memory_space<vmem>>, vector<1x1xf32>
      %c0_19 = arith.constant 0 : index
      %c0_20 = arith.constant 0 : index
      %32 = vector.load %arg6[%c0_19, %c0_20] : memref<1x1xf32, #tpu.memory_space<vmem>>, vector<1x1xf32>
      %33 = arith.divf %31, %32 : vector<1x1xf32>
      %c0_21 = arith.constant 0 : index
      %c0_22 = arith.constant 0 : index
      %34 = vector.load %arg4[%c0_21, %c0_22] : memref<1x1xf32, #tpu.memory_space<vmem>>, vector<1x1xf32>
      tpu.vector_store %arg4[%c0_21, %c0_22], %33 {strides = array<i32>} : memref<1x1xf32, #tpu.memory_space<vmem>>, vector<1x1xf32>,
    } else {
    }
    return
  }
  func.func @transform_0(%arg0: i32) -> (i32, i32) {
    %c0_i32 = arith.constant 0 : i32
    %c0_i32_0 = arith.constant 0 : i32
    return %arg0, %c0_i32 : i32, i32
  }
  func.func @transform_1(%arg0: i32) -> (i32, i32) {
    %c0_i32 = arith.constant 0 : i32
    %c0_i32_0 = arith.constant 0 : i32
    return %arg0, %c0_i32 : i32, i32
  }
  func.func @transform_2(%arg0: i32) -> (i32, i32) {
    %c0_i32 = arith.constant 0 : i32
    %c0_i32_0 = arith.constant 0 : i32
    %c0_i32_1 = arith.constant 0 : i32
    return %c0_i32, %c0_i32_0 : i32, i32
  }
  func.func @transform_3(%arg0: i32) -> (i32, i32) {
    %c0_i32 = arith.constant 0 : i32
    %c0_i32_0 = arith.constant 0 : i32
    %c0_i32_1 = arith.constant 0 : i32
    return %c0_i32, %c0_i32_0 : i32, i32
  }
}

</mosaic_0001>

<llo_original>
// kernel: ohem_ce_loss.2
$region0: #{ohem_ce_loss.2}
  #allocation0 [shape = 'u32[]', space=smem, size = 0x4, offset = 0x4, fixed_abs, tag = 'smem constant byte address 0x4 - core index']
  #allocation1 [shape = 'u32[72,128]{1,0:T(1,128)}', space=vmem, size = 0x9000, scoped, tag = 'internal scratch']
  %s0 = inlined_call_operand.vmem [shape: f32[2,4,8,128], index: 0, kind: input, shape index: {}]
  %s1 = inlined_call_operand.vmem [shape: s32[2,1,8,128], index: 1, kind: input, shape index: {}]
  %s2 = inlined_call_operand.vmem [shape: f32[2,1,8,128], index: 2, kind: output, shape index: {0}]
  %s3 = inlined_call_operand.vmem [shape: f32[2,1,8,128], index: 3, kind: output, shape index: {1}]
  %4 = xla_tuple %s2, %s3
  %s5 = sld [smem:[#allocation0]]
  $region26: #{ohem_ce_loss.2} parent=0
    _
  %s7 = ssub.s32 1, %s5
  %s8 = scalar_select 0, %s7, %s5
  // Predicated region
  $region2: #{ohem_ce_loss.2} parent=0 // pred_check
    _
  $region3: #{ohem_ce_loss.2} parent=0 // pred_check_branch
    %10 = sbr.rel (0) target = $region5
  $region4: #{ohem_ce_loss.2} parent=0 // pred_region
    _
  $region5: #{ohem_ce_loss.2} parent=0 // pred_fallthru
    _
  // Predicated region
  $region6: #{ohem_ce_loss.2} parent=0 // pred_check
    _
  $region7: #{ohem_ce_loss.2} parent=0 // pred_check_branch
    %12 = sbr.rel (0) target = $region9
  $region8: #{ohem_ce_loss.2} parent=0 // pred_region
    _
  $region9: #{ohem_ce_loss.2} parent=0 // pred_fallthru
    _
  %v13 = vld [vmem:[%s1] sm:$0xff]
  %v14 = vld [vmem:[%s1 + $0x8] sm:$0xff]
  %vm15 = vcmp.ne.s32.totalorder %v13, 4294967295
  %vm16 = vcmp.ne.s32.totalorder %v14, 4294967295
  %v17 = vsel %vm15, %v13, 0
  %v18 = vsel %vm16, %v14, 0
  %v19 = vld [vmem:[%s0] sm:$0xff]
  %v20 = vld [vmem:[%s0 + $0x20] sm:$0xff]
  %s21 = scalar_lea.vmem %s0, 8
  %v22 = vld [vmem:[%s21] sm:$0xff]
  %v23 = vld [vmem:[%s21 + $0x20] sm:$0xff]
  %v24 = vmax.f32 %v19, %v22
  %v25 = vmax.f32 %v20, %v23
  %s26 = scalar_lea.vmem %s0, 16
  %v27 = vld [vmem:[%s26] sm:$0xff]
  %v28 = vld [vmem:[%s26 + $0x20] sm:$0xff]
  %v29 = vmax.f32 %v24, %v27
  %v30 = vmax.f32 %v25, %v28
  %s31 = scalar_lea.vmem %s0, 24
  %v32 = vld [vmem:[%s31] sm:$0xff]
  %v33 = vld [vmem:[%s31 + $0x20] sm:$0xff]
  %v34 = vmax.f32 %v29, %v32
  %v35 = vmax.f32 %v30, %v33
  %v36 = vsub.f32 %v19, %v34
  %v37 = vsub.f32 %v20, %v35
  %v38 = vmul.f32 %v36, 1.442695
  %v39 = vpow.pop %v38
  %v40 = vmul.f32 %v37, 1.442695
  %v41 = vpow.pop %v40
  %v42 = vadd.f32 %v39, 0.0
  %v43 = vadd.f32 %v41, 0.0
  %vm44 = vcmp.eq.s32.totalorder %v17, 0
  %vm45 = vcmp.eq.s32.totalorder %v18, 0
  %v46 = vsel %vm44, %v19, 0.0
  %v47 = vsel %vm45, %v20, 0.0
  %v48 = vadd.f32 %v46, 0.0
  %v49 = vadd.f32 %v47, 0.0
  %v50 = vsub.f32 %v22, %v34
  %v51 = vsub.f32 %v23, %v35
  %v52 = vmul.f32 %v50, 1.442695
  %v53 = vpow.pop %v52
  %v54 = vmul.f32 %v51, 1.442695
  %v55 = vpow.pop %v54
  %v56 = vadd.f32 %v42, %v53
  %v57 = vadd.f32 %v43, %v55
  %vm58 = vcmp.eq.s32.totalorder %v17, 1
  %vm59 = vcmp.eq.s32.totalorder %v18, 1
  %v60 = vsel %vm58, %v22, 0.0
  %v61 = vsel %vm59, %v23, 0.0
  %v62 = vadd.f32 %v48, %v60
  %v63 = vadd.f32 %v49, %v61
  %v64 = vsub.f32 %v27, %v34
  %v65 = vsub.f32 %v28, %v35
  %v66 = vmul.f32 %v64, 1.442695
  %v67 = vpow.pop %v66
  %v68 = vmul.f32 %v65, 1.442695
  %v69 = vpow.pop %v68
  %v70 = vadd.f32 %v56, %v67
  %v71 = vadd.f32 %v57, %v69
  %vm72 = vcmp.eq.s32.totalorder %v17, 2
  %vm73 = vcmp.eq.s32.totalorder %v18, 2
  %v74 = vsel %vm72, %v27, 0.0
  %v75 = vsel %vm73, %v28, 0.0
  %v76 = vadd.f32 %v62, %v74
  %v77 = vadd.f32 %v63, %v75
  %v78 = vsub.f32 %v32, %v34
  %v79 = vsub.f32 %v33, %v35
  %v80 = vmul.f32 %v78, 1.442695
  %v81 = vpow.pop %v80
  %v82 = vmul.f32 %v79, 1.442695
  %v83 = vpow.pop %v82
  %v84 = vadd.f32 %v70, %v81
  %v85 = vadd.f32 %v71, %v83
  %vm86 = vcmp.eq.s32.totalorder %v17, 3
  %vm87 = vcmp.eq.s32.totalorder %v18, 3
  %v88 = vsel %vm86, %v32, 0.0
  %v89 = vsel %vm87, %v33, 0.0
  %v90 = vadd.f32 %v76, %v88
  %v91 = vadd.f32 %v77, %v89
  %v92 = vsub.f32 %v34, %v90
  %v93 = vsub.f32 %v35, %v91
  %v94 = vlog2.pop %v84
  %v95 = vmul.f32 %v94, 0.6931472
  %v96 = vlog2.pop %v85
  %v97 = vmul.f32 %v96, 0.6931472
  %v98 = vadd.f32 %v92, %v95
  %v99 = vadd.f32 %v93, %v97
  %v100 = vsub.f32 0.0, %v98
  %v101 = vsub.f32 0.0, %v99
  %v102 = vmul.f32 %v100, 1.442695
  %v103 = vpow.pop %v102
  %v104 = vmul.f32 %v101, 1.442695
  %v105 = vpow.pop %v104
  %v106 = vsel %vm15, %v98, 0.0
  %v107 = vsel %vm16, %v99, 0.0
  %108 = vst [vmem:[%s2] sm:$0xff] %v106
  %109 = vst [vmem:[%s2 + $0x8] sm:$0xff] %v107
  %v110 = vsel %vm15, %v103, inf
  %v111 = vsel %vm16, %v105, inf
  %112 = vst [vmem:[%s3] sm:$0xff] %v110
  %113 = vst [vmem:[%s3 + $0x8] sm:$0xff] %v111
  // Predicated region
  $region10: #{ohem_ce_loss.2} parent=0 // pred_check
    _
  $region11: #{ohem_ce_loss.2} parent=0 // pred_check_branch
    %115 = sbr.rel (0) target = $region13
  $region12: #{ohem_ce_loss.2} parent=0 // pred_region
    _
  $region13: #{ohem_ce_loss.2} parent=0 // pred_fallthru
    _
  // Predicated region
  $region14: #{ohem_ce_loss.2} parent=0 // pred_check
    _
  $region15: #{ohem_ce_loss.2} parent=0 // pred_check_branch
    %117 = sbr.rel (0) target = $region17
  $region16: #{ohem_ce_loss.2} parent=0 // pred_region
    _
  $region17: #{ohem_ce_loss.2} parent=0 // pred_fallthru
    _
  // Predicated region
  $region18: #{ohem_ce_loss.2} parent=0 // pred_check
    _
  $region19: #{ohem_ce_loss.2} parent=0 // pred_check_branch
    %119 = sbr.rel (0) target = $region21
  $region20: #{ohem_ce_loss.2} parent=0 // pred_region
    _
  $region21: #{ohem_ce_loss.2} parent=0 // pred_fallthru
    _
  // Predicated region
  $region22: #{ohem_ce_loss.2} parent=0 // pred_check
    _
  $region23: #{ohem_ce_loss.2} parent=0 // pred_check_branch
    %121 = sbr.rel (0) target = $region25
  $region24: #{ohem_ce_loss.2} parent=0 // pred_region
    _
  $region25: #{ohem_ce_loss.2} parent=0 // pred_fallthru
    _

// kernel: ohem_ce_loss.3
$region0: #{ohem_ce_loss.3}
  #allocation0 [shape = 'u32[]', space=smem, size = 0x4, offset = 0x4, fixed_abs, tag = 'smem constant byte address 0x4 - core index']
  #allocation1 [shape = 'u32[72,128]{1,0:T(1,128)}', space=vmem, size = 0x9000, scoped, tag = 'internal scratch']
  #allocation2 [shape = 'f32[1,1]{1,0:T(1,128)}', space=vmem, size = 0x200, scoped, tag = 'scratch operand']
  #allocation3 [shape = 'f32[1,1]{1,0:T(1,128)}', space=vmem, size = 0x200, scoped, tag = 'scratch operand']
  #allocation4 [shape = 'f32[1,1]{1,0:T(1,128)S(1)}', space=vmem, size = 0x200, scoped, tag = 'scoped memory for ohem_ce_loss.3']
  %s0 = inlined_call_operand.vmem [shape: f32[16,128], index: 0, kind: input, shape index: {}]
  %s1 = inlined_call_operand.vmem [shape: f32[16,128], index: 1, kind: input, shape index: {}]
  %s2 = inlined_call_operand.<no memory space> [shape: f32[1,1], index: 2, kind: input, shape index: {}]
  %s3 = inlined_call_operand.hbm [shape: f32[1,1], index: 3, kind: output, shape index: {}]
  %s4 = sld [smem:[#allocation0]]
  $region53: #{ohem_ce_loss.3} parent=0
    _
  %s6 = ssub.s32 1, %s4
  %s7 = scalar_select 0, %s6, %s4
  %v8 = vstv %s2
  %9 = vst [vmem:[#allocation4] sm:$0x1] %v8
  $region1: #{ohem_ce_loss.3} parent=0
    #allocation5 [shape = 'u8[512]{0}', space=vmem, size = 0x400, scoped, tag = 'output window, operand 0, single buffered']
    #allocation6 [shape = 's32[2]{0}', space=sflag, size = 0x8, scoped, tag = 'scoped memory for ohem_ce_loss.3']
    %10 = vsyncpa [#allocation6], 0
    loop: start=0, step=1, limit=4
    $region2: #{ohem_ce_loss.3} parent=1 // loop_pre_header
      _
    $region3: #{ohem_ce_loss.3} parent=1 // loop_header
      %s12 = sphi 0, %s16
      %p13 = scmp.ge.s32.totalorder %s12, 4
      %s22 = sphi 0, %s24
      %s25 = sphi 0, %s22
      %s26 = sphi 0, %s25
      %s42 = sphi 0, %s26
      %s48 = sphi 0, %s50
      %s51 = sphi 0, %s48
      %s52 = sphi 0, %s51
      %s68 = sphi 0, %s52
      %s72 = sphi 0, %s72
      %s74 = sphi 0, %s72
      %s75 = sphi 0, %s74
      %s89 = sphi 0, %s75
      %s93 = sphi 0, %s93
      %s95 = sphi 0, %s93
      %s96 = sphi 0, %s95
      %s110 = sphi 0, %s96
    $region4: #{ohem_ce_loss.3} parent=1 // loop_header_branch
      %15 = sbr.rel (%p13) target = $region8
    $region5: #{ohem_ce_loss.3} parent=1 // loop_body
      %s17 = ssub.s32 %s12, 1
      %s18 = ssub.s32 %s12, 2
      %s19 = sadd.s32 %s12, 1
      %s20 = ssub.s32 %s12, %s19
      %p21 = scmp.eq.s32.totalorder %s20, 0
      %s23 = sadd.s32 %s22, 1
      %s24 = scalar_select %p21, %s22, %s23
      %p27 = pneg %p21
      %p28 = scmp.eq.s32.totalorder %s12, 1
      %p29 = por %p27, %p28
      %p30 = scmp.ne.s32.totalorder %s22, %s25
      %p31 = scmp.eq.s32.totalorder %s12, 0
      %p32 = por %p30, %p31
      %p33 = scmp.ne.s32.totalorder %s22, %s25
      %p34 = scmp.eq.s32.totalorder %s17, 1
      %p35 = por %p33, %p34
      %p36 = scmp.ne.s32.totalorder %s25, %s26
      %p37 = scmp.eq.s32.totalorder %s17, 0
      %p38 = por %p36, %p37
      %p39 = scmp.ne.s32.totalorder %s25, %s26
      %p40 = scmp.eq.s32.totalorder %s18, 1
      %p41 = por %p39, %p40
      %p43 = scmp.ne.s32.totalorder %s26, %s42
      %p44 = scmp.eq.s32.totalorder %s18, 0
      %p45 = por %p43, %p44
      %s46 = ssub.s32 %s12, %s19
      %p47 = scmp.eq.s32.totalorder %s46, 0
      %s49 = sadd.s32 %s48, 1
      %s50 = scalar_select %p47, %s48, %s49
      %p53 = pneg %p47
      %p54 = scmp.eq.s32.totalorder %s12, 1
      %p55 = por %p53, %p54
      %p56 = scmp.ne.s32.totalorder %s48, %s51
      %p57 = scmp.eq.s32.totalorder %s12, 0
      %p58 = por %p56, %p57
      %p59 = scmp.ne.s32.totalorder %s48, %s51
      %p60 = scmp.eq.s32.totalorder %s17, 1
      %p61 = por %p59, %p60
      %p62 = scmp.ne.s32.totalorder %s51, %s52
      %p63 = scmp.eq.s32.totalorder %s17, 0
      %p64 = por %p62, %p63
      %p65 = scmp.ne.s32.totalorder %s51, %s52
      %p66 = scmp.eq.s32.totalorder %s18, 1
      %p67 = por %p65, %p66
      %p69 = scmp.ne.s32.totalorder %s52, %s68
      %p70 = scmp.eq.s32.totalorder %s18, 0
      %p71 = por %p69, %p70
      %s73 = sadd.s32 %s72, 1
      %p76 = scmp.eq.s32.totalorder %s12, 1
      %p77 = scmp.ne.s32.totalorder %s72, %s74
      %p78 = scmp.eq.s32.totalorder %s12, 0
      %p79 = por %p77, %p78
      %p80 = scmp.ne.s32.totalorder %s72, %s74
      %p81 = scmp.eq.s32.totalorder %s17, 1
      %p82 = por %p80, %p81
      %p83 = scmp.ne.s32.totalorder %s74, %s75
      %p84 = scmp.eq.s32.totalorder %s17, 0
      %p85 = por %p83, %p84
      %p86 = scmp.ne.s32.totalorder %s74, %s75
      %p87 = scmp.eq.s32.totalorder %s18, 1
      %p88 = por %p86, %p87
      %p90 = scmp.ne.s32.totalorder %s75, %s89
      %p91 = scmp.eq.s32.totalorder %s18, 0
      %p92 = por %p90, %p91
      %s94 = sadd.s32 %s93, 1
      %p97 = scmp.eq.s32.totalorder %s12, 1
      %p98 = scmp.ne.s32.totalorder %s93, %s95
      %p99 = scmp.eq.s32.totalorder %s12, 0
      %p100 = por %p98, %p99
      %p101 = scmp.ne.s32.totalorder %s93, %s95
      %p102 = scmp.eq.s32.totalorder %s17, 1
      %p103 = por %p101, %p102
      %p104 = scmp.ne.s32.totalorder %s95, %s96
      %p105 = scmp.eq.s32.totalorder %s17, 0
      %p106 = por %p104, %p105
      %p107 = scmp.ne.s32.totalorder %s95, %s96
      %p108 = scmp.eq.s32.totalorder %s18, 1
      %p109 = por %p107, %p108
      %p111 = scmp.ne.s32.totalorder %s96, %s110
      %p112 = scmp.eq.s32.totalorder %s18, 0
      %p113 = por %p111, %p112
      %p114 = scmp.le.s32.totalorder 1, %s12
      %p115 = scmp.lt.s32.totalorder %s12, 3
      %p116 = pnand %p114, %p115
      %p117 = pneg %p116
      // Predicated region
      $region9: #{ohem_ce_loss.3} parent=5 // pred_check
        _
      $region10: #{ohem_ce_loss.3} parent=5 // pred_check_branch
        %119 = sbr.rel (%p116) target = $region12
      $region11: #{ohem_ce_loss.3} parent=5 // pred_region
        %s120 = ssub.s32 %s12, 1
        // Predicated region
        $region13: #{ohem_ce_loss.3} parent=11 // pred_check
          %p121 = pneg %p85
        $region14: #{ohem_ce_loss.3} parent=11 // pred_check_branch
          %123 = sbr.rel (%p121) target = $region16
        $region15: #{ohem_ce_loss.3} parent=11 // pred_region
          _
        $region16: #{ohem_ce_loss.3} parent=11 // pred_fallthru
          _
      $region12: #{ohem_ce_loss.3} parent=5 // pred_fallthru
        _
      %p124 = scmp.lt.s32.totalorder %s12, 2
      // Predicated region
      $region17: #{ohem_ce_loss.3} parent=5 // pred_check
        %p125 = pneg %p124
      $region18: #{ohem_ce_loss.3} parent=5 // pred_check_branch
        %127 = sbr.rel (%p125) target = $region20
      $region19: #{ohem_ce_loss.3} parent=5 // pred_region
        // Predicated region
        $region21: #{ohem_ce_loss.3} parent=19 // pred_check
          %p128 = pneg %p32
        $region22: #{ohem_ce_loss.3} parent=19 // pred_check_branch
          %130 = sbr.rel (%p128) target = $region24
        $region23: #{ohem_ce_loss.3} parent=19 // pred_region
          %p131 = scmp.lt.s32.totalorder %s12, 1
          %s132 = scalar_select %p131, %s12, 1
          %s133 = smul.addr %s132, 8
          %s134 = scalar_lea.vmem %s0, %s133
        $region24: #{ohem_ce_loss.3} parent=19 // pred_fallthru
          _
        // Predicated region
        $region25: #{ohem_ce_loss.3} parent=19 // pred_check
          %p135 = pneg %p58
        $region26: #{ohem_ce_loss.3} parent=19 // pred_check_branch
          %137 = sbr.rel (%p135) target = $region28
        $region27: #{ohem_ce_loss.3} parent=19 // pred_region
          %p138 = scmp.lt.s32.totalorder %s12, 1
          %s139 = scalar_select %p138, %s12, 1
          %s140 = smul.addr %s139, 8
          %s141 = scalar_lea.vmem %s1, %s140
        $region28: #{ohem_ce_loss.3} parent=19 // pred_fallthru
          _
      $region20: #{ohem_ce_loss.3} parent=5 // pred_fallthru
        _
      %p142 = scmp.le.s32.totalorder 1, %s12
      %p143 = scmp.lt.s32.totalorder %s12, 3
      %p144 = pnand %p142, %p143
      %p145 = pneg %p144
      // Predicated region
      $region29: #{ohem_ce_loss.3} parent=5 // pred_check
        _
      $region30: #{ohem_ce_loss.3} parent=5 // pred_check_branch
        %147 = sbr.rel (%p144) target = $region32
      $region31: #{ohem_ce_loss.3} parent=5 // pred_region
        %s148 = ssub.s32 %s12, 1
        %p149 = scmp.lt.s32.totalorder %s17, 1
        %s150 = scalar_select %p149, %s17, 1
        %s151 = smul.addr %s150, 8
        %s152 = scalar_lea.vmem %s0, %s151
        %p153 = pneg %p38
        %p154 = pneg %p35
        %p155 = scmp.lt.s32.totalorder %s17, 1
        %s156 = scalar_select %p155, %s17, 1
        %s157 = smul.addr %s156, 8
        %s158 = scalar_lea.vmem %s1, %s157
        %p159 = pneg %p64
        %p160 = pneg %p61
        %p161 = pneg %p85
        %p162 = pneg %p82
        %p163 = pneg %p106
        %p164 = pneg %p103
        %p165 = scmp.lt.s32.totalorder %s17, 1
        %s166 = scalar_select %p165, %s17, 1
        %s167 = smul.addr %s166, 8
        %s168 = scalar_lea.vmem %s0, %s167
        %p169 = scmp.lt.s32.totalorder %s17, 1
        %s170 = scalar_select %p169, %s17, 1
        %s171 = smul.addr %s170, 8
        %s172 = scalar_lea.vmem %s1, %s171
        %p173 = scmp.eq.s32.totalorder %s17, 0
        // Predicated region
        $region33: #{ohem_ce_loss.3} parent=31 // pred_check
          %p174 = pneg %p173
        $region34: #{ohem_ce_loss.3} parent=31 // pred_check_branch
          %176 = sbr.rel (%p174) target = $region36
        $region35: #{ohem_ce_loss.3} parent=31 // pred_region
          %vm177 = vcmask 0
          %178 = vst.msk [vmem:[#allocation2] sm:$0x1] %vm177, 0.0
          %179 = vst.msk [vmem:[#allocation3] sm:$0x1] %vm177, 0.0
        $region36: #{ohem_ce_loss.3} parent=31 // pred_fallthru
          _
        %v180 = vld [vmem:[%s168] sm:$0xff]
        %v181 = vld [vmem:[%s172] sm:$0xff]
        %v182 = vld [vmem:[#allocation4] sm:$0x1]
        %v184 = vperm.slane %v182, 0
        %185 = vset.pattern.permute.xlu0 0
        %186 = vperm.xlu0 %185, %v184
        %v187 = vpop.permute.xlu0 %186
        %vm189 = vcmp.lt.f32.partialorder %v181, %v187
        %v190 = vld [vmem:[#allocation2] sm:$0x1]
        %v191 = vsel %vm189, %v180, 0.0
        %192 = vadd.xlane.f32.xlu0 %v191
        %v193 = vpop.xlane.xlu0 %192
        %v194 = vrot.slane %v193, 4
        %v195 = vadd.f32 %v193, %v194
        %v196 = vrot.slane %v195, 2
        %v197 = vadd.f32 %v195, %v196
        %v198 = vrot.slane %v197, 1
        %v199 = vadd.f32 %v197, %v198
        %s200 = vtos %v199
        %v201 = vstv %s200
        %v202 = vadd.f32 %v190, %v201
        %vm203 = vcmask 0
        %204 = vst.msk [vmem:[#allocation2] sm:$0x1] %vm203, %v202
        %v205 = vld [vmem:[#allocation3] sm:$0x1]
        %v206 = vsel %vm189, 1, 0
        %v207 = vcvt.s32.f32 %v206
        %208 = vadd.xlane.f32.xlu0 %v207
        %v209 = vpop.xlane.xlu0 %208
        %v210 = vrot.slane %v209, 4
        %v211 = vadd.f32 %v209, %v210
        %v212 = vrot.slane %v211, 2
        %v213 = vadd.f32 %v211, %v212
        %v214 = vrot.slane %v213, 1
        %v215 = vadd.f32 %v213, %v214
        %s216 = vtos %v215
        %v217 = vstv %s216
        %v218 = vadd.f32 %v205, %v217
        %219 = vst.msk [vmem:[#allocation3] sm:$0x1] %vm203, %v218
        %p220 = scmp.eq.s32.totalorder %s17, 1
        // Predicated region
        $region37: #{ohem_ce_loss.3} parent=31 // pred_check
          %p221 = pneg %p220
        $region38: #{ohem_ce_loss.3} parent=31 // pred_check_branch
          %223 = sbr.rel (%p221) target = $region40
        $region39: #{ohem_ce_loss.3} parent=31 // pred_region
          %v224 = vld [vmem:[#allocation2] sm:$0x1]
          %v225 = vld [vmem:[#allocation3] sm:$0x1]
          %v226 = vrcp.pop %v225
          %v227 = vmul.f32 %v225, %v226
          %v228 = vsub.f32 1.0, %v227
          %v229 = vmul.f32 %v226, %v228
          %v230 = vadd.f32 %v226, %v229
          %vm231 = vweird.f32 %v225
          %vm232 = vweird.f32 %v226
          %vm233 = vmor %vm231, %vm232
          %v234 = vsel %vm233, %v226, %v230
          %v235 = vand.u32 2147483647, %v225
          %vm236 = vcmp.eq.f32.partialorder %v235, 8.507059e+37
          %v237 = vand.u32 %v225, 2147483648
          %v238 = vor.u32 1.1754944e-38, %v237
          %v239 = vsel %vm236, %v238, %v234
          %v240 = vmul.f32 %v224, %v239
          %241 = vst.msk [vmem:[#allocation5] sm:$0x1] %vm203, %v240
        $region40: #{ohem_ce_loss.3} parent=31 // pred_fallthru
          _
        // Predicated region
        $region41: #{ohem_ce_loss.3} parent=31 // pred_check
          %p242 = pneg %p103
        $region42: #{ohem_ce_loss.3} parent=31 // pred_check_branch
          %244 = sbr.rel (%p242) target = $region44
        $region43: #{ohem_ce_loss.3} parent=31 // pred_region
          %246 = vsyncadd [#allocation6], 0
          %s248 = sshll.u32 [#allocation5], 4
          %s249 = int_to_ptr.vmem [resolvable:$true] %s248
          %s250 = sshll.u32 %s3, 4
          %s251 = int_to_ptr.hbm [resolvable:$true] %s250
          %253 = dma.vmem_to_hbm [thread:$0]  %s249, 16, %s251, [#allocation6]
        $region44: #{ohem_ce_loss.3} parent=31 // pred_fallthru
          _
        // Predicated region
        $region45: #{ohem_ce_loss.3} parent=31 // pred_check
          %p254 = pneg %p103
        $region46: #{ohem_ce_loss.3} parent=31 // pred_check_branch
          %256 = sbr.rel (%p254) target = $region48
        $region47: #{ohem_ce_loss.3} parent=31 // pred_region
          %258 = dma.done [#allocation6], 16
        $region48: #{ohem_ce_loss.3} parent=31 // pred_fallthru
          _
      $region32: #{ohem_ce_loss.3} parent=5 // pred_fallthru
        _
      %p259 = scmp.le.s32.totalorder 2, %s12
      // Predicated region
      $region49: #{ohem_ce_loss.3} parent=5 // pred_check
        %p260 = pneg %p259
      $region50: #{ohem_ce_loss.3} parent=5 // pred_check_branch
        %262 = sbr.rel (%p260) target = $region52
      $region51: #{ohem_ce_loss.3} parent=5 // pred_region
        %s263 = ssub.s32 %s12, 2
      $region52: #{ohem_ce_loss.3} parent=5 // pred_fallthru
        _
    $region6: #{ohem_ce_loss.3} parent=1 // loop_footer
      %s16 = sadd.s32 1, %s12
    $region7: #{ohem_ce_loss.3} parent=1 // loop_footer_branch
      %11 = sbr.rel target = $region3
    $region8: #{ohem_ce_loss.3} parent=1 // loop_exit
      _
    %264 = vsyncpa [#allocation6], 1
    %s265 = scalar_lea.sflag [#allocation6], 1
    %266 = vsyncpa %s265, 1

</llo_original>
